<compile_context>
chip_gen: v6e
topology: v6e:2x2x1
jax: 0.10.0
libtpu: 0.0.40
codegen_flags: <defaults>
</compile_context>

<pallas_src>
import functools

import jax
import jax.numpy as jnp
from jax.experimental import pallas as pl
from jax.experimental.pallas import tpu as pltpu

_LANE = 128
_SUBLANE = 8
_MAX_TILE_ROWS = 2048  # (2, 2048, 128) f32 block = 2 MiB; 2x double-buffer + acc ~ 6 MiB VMEM


def _round_up(x, m):
    return -(-x // m) * m


def _excess_return_loss_kernel(stats_ref, x_ref, out_ref, acc_ref, *, batch_size):
    # stats_ref: (2,)              f32 SMEM   [mean(signals), mean(returns - rf)]
    # x_ref:     (2, TILE_R, 128)  f32 VMEM   row0 = signals - ms, row1 = (returns - rf) - mr
    # out_ref:   (1, 1)            f32 SMEM   scalar loss
    # acc_ref:   (2, TILE_R, 128)  f32 VMEM   elementwise running sums of squares
    i = pl.program_id(0)

    @pl.when(i == 0)
    def _init():
        acc_ref[...] = jnp.zeros_like(acc_ref)

    x = x_ref[...]
    acc_ref[...] += x * x  # pure VPU; zero-padded entries contribute nothing

    @pl.when(i == pl.num_programs(0) - 1)
    def _finalize():
        sum_sc2 = jnp.sum(acc_ref[0])            # sum (s - ms)^2
        sum_rc2 = jnp.sum(acc_ref[1])            # sum (r - mr)^2
        ms = stats_ref[0]
        mr = stats_ref[1]
        bf = jnp.float32(batch_size)
        n = bf * bf                              # implicit (B, B) excess matrix size
        vs = sum_sc2 / bf                        # population variance of signals
        vr = sum_rc2 / bf                        # population variance of excess returns
        mean = mr * ms
        var_pop = vr * vs + vr * ms * ms + vs * mr * mr   # all terms >= 0: no cancellation
        var = var_pop * n / (n - jnp.float32(1.0))        # unbiased (ddof=1), matches torch.std
        std = jnp.sqrt(var)
        out_ref[0, 0] = mean / (std + jnp.float32(1e-8))


def excess_return_loss(returns, probabilities, risk_free_rate=0.0,
                       max_tile_rows=_MAX_TILE_ROWS):
    """returns: (B,) or (B,1); probabilities: (B,3) -> scalar f32 loss."""
    returns = jnp.asarray(returns, jnp.float32).reshape(-1)      # (B,)
    probabilities = jnp.asarray(probabilities, jnp.float32)      # (B, 3)
    B = returns.shape[0]

    rf = jnp.asarray(risk_free_rate, jnp.float32)
    signals = probabilities[:, 2] - probabilities[:, 0]          # buy - sell, in the wrapper
    r = returns - rf                                             # rf handled outside the kernel

    # Cheap O(B) means, fused by XLA with the pack below; centering makes the kernel's
    # second-moment accumulation numerically robust (exact math, no cancellation).
    ms = jnp.mean(signals)
    mr = jnp.mean(r)

    # Sublane/lane-dense slab: (2, R, 128) with R a multiple of the tile rows.
    max_tile_rows = max(_SUBLANE, (int(max_tile_rows) // _SUBLANE) * _SUBLANE)
    rows_needed = -(-B // _LANE)                                 # ceil(B / 128)
    tile_rows = min(_round_up(rows_needed, _SUBLANE), max_tile_rows)
    num_tiles = -(-rows_needed // tile_rows)
    padded_rows = num_tiles * tile_rows
    padded_len = padded_rows * _LANE

    data = jnp.stack([signals - ms, r - mr], axis=0)             # (2, B), centered
    data = jnp.pad(data, ((0, 0), (0, padded_len - B)))          # zero pad: sums of sq unaffected
    data = data.reshape(2, padded_rows, _LANE)                   # full (8,128) vregs in-kernel

    stats = jnp.stack([ms, mr])                                  # (2,) f32 -> SMEM

    out = pl.pallas_call(
        functools.partial(_excess_return_loss_kernel, batch_size=B),
        out_shape=jax.ShapeDtypeStruct((1, 1), jnp.float32),
        grid_spec=pltpu.PrefetchScalarGridSpec(
            num_scalar_prefetch=0,
            grid=(num_tiles,),
            in_specs=[
                pl.BlockSpec(memory_space=pltpu.MemorySpace.SMEM),            # [ms, mr]
                pl.BlockSpec((2, tile_rows, _LANE), lambda i: (0, i, 0)),     # data tiles
            ],
            out_specs=pl.BlockSpec(memory_space=pltpu.MemorySpace.SMEM),
            scratch_shapes=[pltpu.VMEM((2, tile_rows, _LANE), jnp.float32)],
        ),
        compiler_params=pltpu.CompilerParams(
            dimension_semantics=("arbitrary",)),                 # accumulator carried across steps
    )(stats, data)
    return out[0, 0]


def _reference(returns, probabilities, risk_free_rate=0.0):
    """Pure-JAX reference mirroring the PyTorch code (incl. the (B,B) broadcast)."""
    returns = jnp.asarray(returns, jnp.float32)
    probabilities = jnp.asarray(probabilities, jnp.float32)
    if returns.ndim == 1:
        returns = returns[:, None]
    sell = probabilities[:, 0]
    buy = probabilities[:, 2]
    signals = buy - sell
    excess = signals * (returns - risk_free_rate)                # (B, B)
    mean = jnp.mean(excess)
    std = jnp.std(excess, ddof=1)                                # torch.std default: unbiased
    return mean / (std + 1e-8)


if __name__ == "__main__":
    key = jax.random.PRNGKey(0)
    k1, k2, k3, k4 = jax.random.split(key, 4)

    # Small case (single grid step).
    B = 8
    returns = jax.random.normal(k1, (B,), dtype=jnp.float32) * 0.02 + 0.01
    probabilities = jax.nn.softmax(jax.random.normal(k2, (B, 3), dtype=jnp.float32), axis=-1)
    loss = jax.block_until_ready(excess_return_loss(returns, probabilities, risk_free_rate=0.0))
    ref = _reference(returns, probabilities, risk_free_rate=0.0)
    assert jnp.allclose(loss, ref, rtol=2e-3, atol=2e-6), (loss, ref)

    # Larger case with a nonzero risk-free rate, forced onto multiple grid steps
    # (tiny 8-row tiles -> ceil(1500/128)=12 rows -> 2 grid steps) to exercise the
    # init / accumulate / finalize partial-sum path.
    B2 = 1500
    returns2 = jax.random.normal(k3, (B2,), dtype=jnp.float32) * 0.02 + 0.005
    probabilities2 = jax.nn.softmax(jax.random.normal(k4, (B2, 3), dtype=jnp.float32), axis=-1)
    loss2 = jax.block_until_ready(
        excess_return_loss(returns2, probabilities2, risk_free_rate=0.001, max_tile_rows=8))
    ref2 = _reference(returns2, probabilities2, risk_free_rate=0.001)
    assert jnp.allclose(loss2, ref2, rtol=2e-3, atol=2e-6), (loss2, ref2)

    print("KERNEL_OK")
</pallas_src>

<mosaic_0001>
module attributes {stable_mosaic.version = 11 : i64} {
  func.func @_excess_return_loss_kernel(%arg0: i32, %arg1: memref<2xf32, #tpu.memory_space<smem>>, %arg2: memref<2x8x128xf32, #tpu.memory_space<vmem>>, %arg3: memref<1x1xf32, #tpu.memory_space<smem>>, %arg4: memref<2x8x128xf32, #tpu.memory_space<vmem>>) attributes {dimension_semantics = [#tpu.dimension_semantics<arbitrary>], iteration_bounds = array<i64: 1>, scalar_prefetch = 0 : i64, scratch_operands = 1 : i64, tpu.core_type = #tpu.core_type<tc>, window_params = [{transform_indices = @transform_0, window_bounds = array<i64: 2>}, {transform_indices = @transform_1, window_bounds = array<i64: 2, 8, 128>}, {transform_indices = @transform_2, window_bounds = array<i64: 1, 1>}]} {
    %c0_i32 = arith.constant 0 : i32
    %0 = arith.cmpi eq, %arg0, %c0_i32 : i32
    %1 = arith.extui %0 : i1 to i32
    %c0_i32_0 = arith.constant 0 : i32
    %2 = arith.cmpi ne, %1, %c0_i32_0 : i32
    scf.if %2 {
      %cst = arith.constant 0.000000e+00 : f32
      %11 = vector.broadcast %cst : f32 to vector<2x8x128xf32>
      %c0_11 = arith.constant 0 : index
      %c0_12 = arith.constant 0 : index
      %c0_13 = arith.constant 0 : index
      %12 = vector.load %arg4[%c0_11, %c0_12, %c0_13] : memref<2x8x128xf32, #tpu.memory_space<vmem>>, vector<2x8x128xf32>
      tpu.vector_store %arg4[%c0_11, %c0_12, %c0_13], %11 {strides = array<i32>} : memref<2x8x128xf32, #tpu.memory_space<vmem>>, vector<2x8x128xf32>,
    } else {
    }
    %c0 = arith.constant 0 : index
    %c0_1 = arith.constant 0 : index
    %c0_2 = arith.constant 0 : index
    %3 = vector.load %arg2[%c0, %c0_1, %c0_2] : memref<2x8x128xf32, #tpu.memory_space<vmem>>, vector<2x8x128xf32>
    %c0_3 = arith.constant 0 : index
    %c0_4 = arith.constant 0 : index
    %c0_5 = arith.constant 0 : index
    %4 = vector.load %arg4[%c0_3, %c0_4, %c0_5] : memref<2x8x128xf32, #tpu.memory_space<vmem>>, vector<2x8x128xf32>
    %5 = arith.mulf %3, %3 : vector<2x8x128xf32>
    %6 = arith.addf %4, %5 : vector<2x8x128xf32>
    %c0_6 = arith.constant 0 : index
    %c0_7 = arith.constant 0 : index
    %c0_8 = arith.constant 0 : index
    %7 = vector.load %arg4[%c0_6, %c0_7, %c0_8] : memref<2x8x128xf32, #tpu.memory_space<vmem>>, vector<2x8x128xf32>
    tpu.vector_store %arg4[%c0_6, %c0_7, %c0_8], %6 {strides = array<i32>} : memref<2x8x128xf32, #tpu.memory_space<vmem>>, vector<2x8x128xf32>,
    %c0_i32_9 = arith.constant 0 : i32
    %8 = arith.cmpi eq, %arg0, %c0_i32_9 : i32
    %9 = arith.extui %8 : i1 to i32
    %c0_i32_10 = arith.constant 0 : i32
    %10 = arith.cmpi ne, %9, %c0_i32_10 : i32
    scf.if %10 {
      %c0_11 = arith.constant 0 : index
      %c0_12 = arith.constant 0 : index
      %c0_13 = arith.constant 0 : index
      %11 = vector.load %arg4[%c0_11, %c0_12, %c0_13] : memref<2x8x128xf32, #tpu.memory_space<vmem>>, vector<1x8x128xf32>
      %12 = vector.shape_cast %11 : vector<1x8x128xf32> to vector<8x128xf32>
      %13 = vector.shape_cast %12 : vector<8x128xf32> to vector<1x8x128xf32>
      %cst = arith.constant dense<0.000000e+00> : vector<1xf32>
      %14 = vector.multi_reduction <add>, %13, %cst [1, 2] : vector<1x8x128xf32> to vector<1xf32>
      %15 = vector.shape_cast %14 : vector<1xf32> to vector<1x1x1xf32>
      %16 = vector.extract %15[0, 0, 0] : f32 from vector<1x1x1xf32>
      %c1 = arith.constant 1 : index
      %c0_14 = arith.constant 0 : index
      %c0_15 = arith.constant 0 : index
      %17 = vector.load %arg4[%c1, %c0_14, %c0_15] : memref<2x8x128xf32, #tpu.memory_space<vmem>>, vector<1x8x128xf32>
      %18 = vector.shape_cast %17 : vector<1x8x128xf32> to vector<8x128xf32>
      %19 = vector.shape_cast %18 : vector<8x128xf32> to vector<1x8x128xf32>
      %cst_16 = arith.constant dense<0.000000e+00> : vector<1xf32>
      %20 = vector.multi_reduction <add>, %19, %cst_16 [1, 2] : vector<1x8x128xf32> to vector<1xf32>
      %21 = vector.shape_cast %20 : vector<1xf32> to vector<1x1x1xf32>
      %22 = vector.extract %21[0, 0, 0] : f32 from vector<1x1x1xf32>
      %c0_17 = arith.constant 0 : index
      %23 = memref.load %arg1[%c0_17] : memref<2xf32, #tpu.memory_space<smem>>
      %c1_18 = arith.constant 1 : index
      %24 = memref.load %arg1[%c1_18] : memref<2xf32, #tpu.memory_space<smem>>
      %cst_19 = arith.constant 8.000000e+00 : f32
      %cst_20 = arith.constant 8.000000e+00 : f32
      %25 = arith.mulf %cst_19, %cst_20 : f32
      %cst_21 = arith.constant 8.000000e+00 : f32
      %26 = arith.divf %16, %cst_21 : f32
      %cst_22 = arith.constant 8.000000e+00 : f32
      %27 = arith.divf %22, %cst_22 : f32
      %28 = arith.mulf %24, %23 : f32
      %29 = arith.mulf %27, %26 : f32
      %30 = arith.mulf %27, %23 : f32
      %31 = arith.mulf %30, %23 : f32
      %32 = arith.addf %29, %31 : f32
      %33 = arith.mulf %26, %24 : f32
      %34 = arith.mulf %33, %24 : f32
      %35 = arith.addf %32, %34 : f32
      %36 = arith.mulf %35, %25 : f32
      %cst_23 = arith.constant 1.000000e+00 : f32
      %37 = arith.subf %25, %cst_23 : f32
      %38 = arith.divf %36, %37 : f32
      %39 = math.sqrt %38 : f32
      %cst_24 = arith.constant 9.99999993E-9 : f32
      %40 = arith.addf %39, %cst_24 : f32
      %41 = arith.divf %28, %40 : f32
      %c0_25 = arith.constant 0 : index
      %c0_26 = arith.constant 0 : index
      %42 = memref.load %arg3[%c0_25, %c0_26] : memref<1x1xf32, #tpu.memory_space<smem>>
      memref.store %41, %arg3[%c0_25, %c0_26] : memref<1x1xf32, #tpu.memory_space<smem>>
    } else {
    }
    return
  }
  func.func @transform_0(%arg0: i32) -> i32 {
    %c0_i32 = arith.constant 0 : i32
    %c0_i32_0 = arith.constant 0 : i32
    return %c0_i32 : i32
  }
  func.func @transform_1(%arg0: i32) -> (i32, i32, i32) {
    %c0_i32 = arith.constant 0 : i32
    %c0_i32_0 = arith.constant 0 : i32
    %c0_i32_1 = arith.constant 0 : i32
    return %c0_i32, %arg0, %c0_i32_0 : i32, i32, i32
  }
  func.func @transform_2(%arg0: i32) -> (i32, i32) {
    %c0_i32 = arith.constant 0 : i32
    %c0_i32_0 = arith.constant 0 : i32
    %c0_i32_1 = arith.constant 0 : i32
    return %c0_i32, %c0_i32_0 : i32, i32
  }
}

</mosaic_0001>

<llo_original>
// kernel: tpu_custom_call.1
$region0: #{tpu_custom_call.1}
  #allocation0 [shape = 'u32[]', space=smem, size = 0x4, offset = 0x4, fixed_abs, tag = 'smem constant byte address 0x4 - core index']
  #allocation1 [shape = 'u32[144,128]{1,0:T(1,128)}', space=vmem, size = 0x12000, scoped, tag = 'internal scratch']
  #allocation2 [shape = 'f32[2,8,128]{2,1,0:T(8,128)}', space=vmem, size = 0x2000, scoped, tag = 'scratch operand']
  %s0 = inlined_call_operand.hbm [shape: f32[2], index: 0, kind: input, shape index: {}]
  %s1 = inlined_call_operand.hbm [shape: f32[2,8,128], index: 1, kind: input, shape index: {}]
  %s2 = inlined_call_operand.hbm [shape: f32[1,1], index: 2, kind: output, shape index: {}]
  %s3 = sld [smem:[#allocation0]]
  $region34: #{tpu_custom_call.1} parent=0
    _
  %s5 = ssub.s32 1, %s3
  %s6 = scalar_select 0, %s5, %s3
  $region1: #{tpu_custom_call.1} parent=0
    #allocation3 [shape = 'u8[512]{0}', space=smem, size = 0x200, scoped, tag = 'input window, operand 0, single buffered']
    #allocation4 [shape = 's32[1]{0}', space=sflag, size = 0x4, scoped, tag = 'scoped memory for tpu_custom_call.1']
    #allocation5 [shape = 's32[1]{0}', space=sflag, size = 0x4, scoped, tag = 'scoped memory for tpu_custom_call.1']
    #allocation6 [shape = 's32[1]{0}', space=sflag, size = 0x4, scoped, tag = 'scoped memory for tpu_custom_call.1']
    #allocation7 [shape = 'u8[8192]{0}', space=vmem, size = 0x2000, scoped, tag = 'input window, operand 1, single buffered']
    #allocation8 [shape = 'u8[512]{0}', space=smem, size = 0x200, scoped, tag = 'output window, operand 0, single buffered']
    %7 = vsyncpa [#allocation5], 0
    %8 = vsyncpa [#allocation4], 0
    %9 = vsyncpa [#allocation6], 0
    // Predicated region
    $region2: #{tpu_custom_call.1} parent=1 // pred_check
      _
    $region3: #{tpu_custom_call.1} parent=1 // pred_check_branch
      %11 = sbr.rel (0) target = $region5
    $region4: #{tpu_custom_call.1} parent=1 // pred_region
      %s13 = ssub.s32 16, 16
      %14 = vsyncadd [#allocation5], %s13
      %17 = dma.hbm_to_smem %s0, 16, [#allocation3], [#allocation5]
    $region5: #{tpu_custom_call.1} parent=1 // pred_fallthru
      _
    // Predicated region
    $region6: #{tpu_custom_call.1} parent=1 // pred_check
      _
    $region7: #{tpu_custom_call.1} parent=1 // pred_check_branch
      %19 = sbr.rel (0) target = $region9
    $region8: #{tpu_custom_call.1} parent=1 // pred_region
      %s21 = ssub.s32 256, 256
      %22 = vsyncadd [#allocation4], %s21
      %s23 = sshll.u32 [#allocation7], 4
      %s24 = int_to_ptr.vmem [resolvable:$true] %s23
      %29 = dma.hbm_to_vmem [thread:$0]  %s1, 256, %s24, [#allocation4], 128, 128, 8
    $region9: #{tpu_custom_call.1} parent=1 // pred_fallthru
      _
    // Predicated region
    $region10: #{tpu_custom_call.1} parent=1 // pred_check
      _
    $region11: #{tpu_custom_call.1} parent=1 // pred_check_branch
      %31 = sbr.rel (0) target = $region13
    $region12: #{tpu_custom_call.1} parent=1 // pred_region
      %32 = dma.done [#allocation5], 16
    $region13: #{tpu_custom_call.1} parent=1 // pred_fallthru
      _
    // Predicated region
    $region14: #{tpu_custom_call.1} parent=1 // pred_check
      _
    $region15: #{tpu_custom_call.1} parent=1 // pred_check_branch
      %34 = sbr.rel (0) target = $region17
    $region16: #{tpu_custom_call.1} parent=1 // pred_region
      %35 = dma.done [#allocation4], 256
    $region17: #{tpu_custom_call.1} parent=1 // pred_fallthru
      _
    %36 = sfence
    %p37 = scmp.eq.s32.totalorder 0, 0
    // Predicated region
    $region18: #{tpu_custom_call.1} parent=1 // pred_check
      %p38 = pneg %p37
    $region19: #{tpu_custom_call.1} parent=1 // pred_check_branch
      %40 = sbr.rel (%p38) target = $region21
    $region20: #{tpu_custom_call.1} parent=1 // pred_region
      %41 = vst [vmem:[#allocation2] sm:$0xff] 0.0
      %42 = vst [vmem:[#allocation2 + $0x8] sm:$0xff] 0.0
    $region21: #{tpu_custom_call.1} parent=1 // pred_fallthru
      _
    %v43 = vld [vmem:[#allocation7] sm:$0xff]
    %v44 = vld [vmem:[#allocation7 + $0x8] sm:$0xff]
    %v45 = vld [vmem:[#allocation2] sm:$0xff]
    %v46 = vld [vmem:[#allocation2 + $0x8] sm:$0xff]
    %v47 = vmul.f32 %v43, %v43
    %v48 = vmul.f32 %v44, %v44
    %v49 = vadd.f32 %v45, %v47
    %v50 = vadd.f32 %v46, %v48
    %51 = vst [vmem:[#allocation2] sm:$0xff] %v49
    %52 = vst [vmem:[#allocation2 + $0x8] sm:$0xff] %v50
    // Predicated region
    $region22: #{tpu_custom_call.1} parent=1 // pred_check
      %p53 = pneg %p37
    $region23: #{tpu_custom_call.1} parent=1 // pred_check_branch
      %55 = sbr.rel (%p53) target = $region25
    $region24: #{tpu_custom_call.1} parent=1 // pred_region
      %v56 = vld [vmem:[#allocation2] sm:$0xff]
      %57 = vadd.xlane.f32.xlu0 %v56
      %v58 = vpop.xlane.xlu0 %57
      %v59 = vrot.slane %v58, 4
      %v60 = vadd.f32 %v58, %v59
      %v61 = vrot.slane %v60, 2
      %v62 = vadd.f32 %v60, %v61
      %v63 = vrot.slane %v62, 1
      %v64 = vadd.f32 %v62, %v63
      %s65 = vtos %v64
      %s66 = scalar_lea.vmem [#allocation2], 8
      %v67 = vld [vmem:[%s66] sm:$0xff]
      %68 = vadd.xlane.f32.xlu0 %v67
      %v69 = vpop.xlane.xlu0 %68
      %v70 = vrot.slane %v69, 4
      %v71 = vadd.f32 %v69, %v70
      %v72 = vrot.slane %v71, 2
      %v73 = vadd.f32 %v71, %v72
      %v74 = vrot.slane %v73, 1
      %v75 = vadd.f32 %v73, %v74
      %s76 = vtos %v75
      %s77 = sld [smem:[#allocation3]]
      %s78 = sld [smem:[#allocation3 + $0x1]]
      %v79 = vrcp.pop 8.0
      %s80 = vtos %v79
      %s81 = smul.f32 %s65, %s80
      %v82 = vrcp.pop 8.0
      %s83 = vtos %v82
      %s84 = smul.f32 %s76, %s83
      %s85 = smul.f32 %s78, %s77
      %s86 = smul.f32 %s84, %s81
      %s87 = smul.f32 %s84, %s77
      %s88 = smul.f32 %s87, %s77
      %s89 = sadd.f32 %s86, %s88
      %s90 = smul.f32 %s81, %s78
      %s91 = smul.f32 %s90, %s78
      %s92 = sadd.f32 %s89, %s91
      %s93 = smul.f32 %s92, 64.0
      %v94 = vrcp.pop 63.0
      %s95 = vtos %v94
      %s96 = smul.f32 %s93, %s95
      %v97 = vstv %s96
      %v98 = vrsqrt.pop %v97
      %v99 = vmul.f32 %v97, %v98
      %vm100 = vcmp.eq.f32.partialorder %v97, inf
      %v101 = vsel %vm100, %v97, %v99
      %vm102 = vcmp.eq.f32.partialorder %v97, 0.0
      %v103 = vand.u32 %v97, 2147483648
      %v104 = vsel %vm102, %v103, %v101
      %s105 = vtos %v104
      %s106 = sadd.f32 %s105, 1e-08
      %v107 = vstv %s106
      %v108 = vrcp.pop %v107
      %s109 = vtos %v108
      %s110 = smul.f32 %s85, %s109
      %s111 = scalar_lea.smem [#allocation8], 0
      %112 = sst [smem:[%s111]] %s110
    $region25: #{tpu_custom_call.1} parent=1 // pred_fallthru
      _
    // Predicated region
    $region26: #{tpu_custom_call.1} parent=1 // pred_check
      _
    $region27: #{tpu_custom_call.1} parent=1 // pred_check_branch
      %114 = sbr.rel (0) target = $region29
    $region28: #{tpu_custom_call.1} parent=1 // pred_region
      %s116 = ssub.s32 16, 16
      %117 = vsyncadd [#allocation6], %s116
      %120 = dma.smem_to_hbm [#allocation8], 16, %s2, [#allocation6]
    $region29: #{tpu_custom_call.1} parent=1 // pred_fallthru
      _
    // Predicated region
    $region30: #{tpu_custom_call.1} parent=1 // pred_check
      _
    $region31: #{tpu_custom_call.1} parent=1 // pred_check_branch
      %122 = sbr.rel (0) target = $region33
    $region32: #{tpu_custom_call.1} parent=1 // pred_region
      %123 = dma.done [#allocation6], 16
    $region33: #{tpu_custom_call.1} parent=1 // pred_fallthru
      _
    %124 = sfence
    %125 = vsyncpa [#allocation4], 1
    %126 = vsyncpa [#allocation5], 1
    %127 = vsyncpa [#allocation6], 1

</llo_original>
